<compile_context>
chip_gen: v7x
topology: tpu7x:2x2x1
jax: 0.10.0
libtpu: 0.0.40
codegen_flags: <defaults>
</compile_context>

<pallas_src>
import math
import jax
import jax.numpy as jnp
from jax.experimental import pallas as pl
from jax.experimental.pallas import tpu as pltpu


def _round_up(x, m):
    return ((x + m - 1) // m) * m


def _lgm_kernel(alpha, tile_c):
    # NOTE: alpha is baked in as a compile-time constant (matches the module,
    # where alpha is fixed at construction time); changing it retraces.
    def kernel(feat_ref, centers_t_ref, nh_fsq_ref, nh_csq_ref, label_ref,
               logits_ref, margin_ref):
        j = pl.program_id(1)

        feat = feat_ref[...]            # (TB, D_pad)   mxu_dtype
        centers_t = centers_t_ref[...]  # (D_pad, TC)   mxu_dtype
        labels = label_ref[...]         # (TB, 1)       i32

        # cross[b, c] = <f_b, c_c>   -- one MXU matmul, f32 accumulation.
        cross = jax.lax.dot_general(
            feat, centers_t,
            dimension_numbers=(((1,), (0,)), ((), ())),
            preferred_element_type=jnp.float32)          # (TB, TC)

        # logits = -0.5 * dist = cross - 0.5*||f||^2 - 0.5*||c||^2
        logits = cross + nh_fsq_ref[...] + nh_csq_ref[...]
        # dist >= 0 exactly in the reference formulation -> logits <= 0;
        # clip the cancellation noise of the matmul reformulation.
        logits = jnp.minimum(logits, 0.0)

        tb, tc = logits.shape
        cls_iota = jax.lax.broadcasted_iota(jnp.int32, (tb, tc), 1) + j * tile_c
        onehot = (cls_iota == labels).astype(jnp.float32)  # (TB, TC)

        logits_ref[...] = logits.astype(logits_ref.dtype)
        # margin_logits = logits * (alpha * onehot + 1)
        margin_ref[...] = (logits * (onehot * alpha + 1.0)).astype(margin_ref.dtype)

    return kernel


def lgm_loss_v0(feat, label, centers, alpha=1.0, *,
                mxu_dtype=jnp.float32, out_dtype=jnp.float32):
    """Pallas implementation of LGMLoss_v0.forward.

    feat:    (B, D) float32
    label:   (B,)   int32
    centers: (C, D) float32
    Returns (logits (B, C), margin_logits (B, C), likelihood scalar).
    """
    B, D = feat.shape
    C, _ = centers.shape

    # ---- Tile sizing -------------------------------------------------------
    # Class tile: TC = 256 fills the v6e/v7x MXU native N dimension and gives
    # wide unmasked lane-dense stores; tiny class counts stay at 128.
    if C <= 128:
        C_pad, TC = 128, 128
    else:
        C_pad = _round_up(C, 256)
        TC = 256
    nc = C_pad // TC

    # Lane-align the contraction dim so every vmatmul pass is full.
    D_pad = _round_up(D, 128)

    in_bytes = jnp.dtype(mxu_dtype).itemsize
    out_bytes = jnp.dtype(out_dtype).itemsize

    # Batch tile: as large as VMEM allows (centers are re-streamed from HBM
    # once per batch tile), chosen to minimise batch padding, sublane-aligned.
    # Budget kept conservative for v7x's 64 MiB physical VMEM per TensorCore.
    VMEM_BUDGET = 40 * 1024 * 1024
    tb_max = 512
    while True:
        nb = -(-B // tb_max)                         # ceil(B / tb_max)
        TB = _round_up(-(-B // nb), 8)               # minimal-padding tile
        est_vmem = 2 * (TB * D_pad * in_bytes        # feat tile (double-buffered)
                        + D_pad * TC * in_bytes      # centers tile
                        + 2 * TB * TC * out_bytes    # logits + margin tiles
                        + TB * 8 + TC * 4)           # row norms + labels
        if est_vmem <= VMEM_BUDGET or tb_max <= 8:
            break
        tb_max = max(tb_max // 2, 8)
    B_pad = nb * TB

    # ---- Wrapper-side prep (pad only when needed, norms hoisted in f32) ----
    feat32 = feat.astype(jnp.float32)
    cent32 = centers.astype(jnp.float32)
    if D_pad != D:
        feat32 = jnp.pad(feat32, ((0, 0), (0, D_pad - D)))
        cent32 = jnp.pad(cent32, ((0, 0), (0, D_pad - D)))
    if B_pad != B:
        feat32 = jnp.pad(feat32, ((0, B_pad - B), (0, 0)))
    if C_pad != C:
        cent32 = jnp.pad(cent32, ((0, C_pad - C), (0, 0)))

    # Pre-scaled row norms (-0.5 * ||.||^2), always f32.
    neg_half_fsq = -0.5 * jnp.sum(feat32 * feat32, axis=1, keepdims=True)   # (B_pad, 1)
    neg_half_csq = -0.5 * jnp.sum(cent32 * cent32, axis=1)[None, :]         # (1, C_pad)

    # Pre-transpose centers once so the kernel's RHS contracts its sublane dim.
    feat_mm = feat32.astype(mxu_dtype)                                       # (B_pad, D_pad)
    centers_t = cent32.T.astype(mxu_dtype)                                   # (D_pad, C_pad)

    label_i32 = label.astype(jnp.int32)
    label_p = label_i32
    if B_pad != B:
        label_p = jnp.pad(label_i32, (0, B_pad - B), constant_values=-1)     # pad rows never match
    label2d = label_p.reshape(B_pad, 1)

    vmem_limit = int(min(64 * 1024 * 1024,
                         max(32 * 1024 * 1024, est_vmem + (4 << 20))))

    logits_p, margin_p = pl.pallas_call(
        _lgm_kernel(float(alpha), TC),
        out_shape=(
            jax.ShapeDtypeStruct((B_pad, C_pad), out_dtype),
            jax.ShapeDtypeStruct((B_pad, C_pad), out_dtype),
        ),
        grid=(nb, nc),
        in_specs=[
            pl.BlockSpec((TB, D_pad), lambda i, j: (i, 0)),   # feat
            pl.BlockSpec((D_pad, TC), lambda i, j: (0, j)),   # centers^T
            pl.BlockSpec((TB, 1), lambda i, j: (i, 0)),       # -0.5||feat||^2
            pl.BlockSpec((1, TC), lambda i, j: (0, j)),       # -0.5||centers||^2
            pl.BlockSpec((TB, 1), lambda i, j: (i, 0)),       # labels
        ],
        out_specs=(
            pl.BlockSpec((TB, TC), lambda i, j: (i, j)),      # logits
            pl.BlockSpec((TB, TC), lambda i, j: (i, j)),      # margin_logits
        ),
        compiler_params=pltpu.CompilerParams(
            dimension_semantics=("parallel", "parallel"),
            vmem_limit_bytes=vmem_limit),
    )(feat_mm, centers_t, neg_half_fsq, neg_half_csq, label2d)

    logits = logits_p[:B, :C]
    margin_logits = margin_p[:B, :C]

    # likelihood = sum_b ||f_b - c_{y_b}||^2 / (2B) = -2 * sum_b logits[b, y_b] / (2B)
    picked = jnp.take_along_axis(logits.astype(jnp.float32),
                                 label_i32[:, None], axis=1)
    likelihood = -jnp.sum(picked) / B
    return logits, margin_logits, likelihood


def init_centers(key, num_classes, feat_dim):
    # torch.nn.init.kaiming_uniform_(centers, a=sqrt(5)):
    # fan_in = feat_dim, gain = sqrt(2/(1+5)), bound = gain*sqrt(3/fan_in) = 1/sqrt(fan_in)
    bound = 1.0 / math.sqrt(feat_dim)
    return jax.random.uniform(
        key, (num_classes, feat_dim), minval=-bound, maxval=bound,
        dtype=jnp.float32)


def reference(feat, label, centers, alpha=1.0):
    B = feat.shape[0]
    C = centers.shape[0]
    diff = feat[:, None, :] - centers[None, :, :]
    dist = jnp.sum(diff * diff, axis=-1)
    onehot = jax.nn.one_hot(label, C, dtype=jnp.float32) * alpha + 1.0
    logits = -0.5 * dist
    margin_logits = -0.5 * dist * onehot
    cdiff = feat - centers[label]
    likelihood = jnp.sum(cdiff ** 2) / (2.0 * B)
    return logits, margin_logits, likelihood


if __name__ == "__main__":
    key = jax.random.PRNGKey(0)
    k_feat, k_lab, k_cen = jax.random.split(key, 3)

    batch = 8
    num_classes = 8
    feat_dim = 128
    alpha = 1.0

    feat = jax.random.normal(k_feat, (batch, feat_dim), dtype=jnp.float32)
    label = jax.random.randint(k_lab, (batch,), 0, num_classes, dtype=jnp.int32)
    centers = init_centers(k_cen, num_classes, feat_dim)

    logits, margin_logits, likelihood = lgm_loss_v0(feat, label, centers, alpha)
    jax.block_until_ready((logits, margin_logits, likelihood))

    r_logits, r_margin, r_lik = reference(feat, label, centers, alpha)
    # The matmul reformulation of ||f - c||^2 rounds differently from the
    # explicit subtract-square, so tolerances are slightly loosened.
    assert jnp.allclose(logits, r_logits, rtol=1e-4, atol=2e-3), "logits mismatch"
    assert jnp.allclose(margin_logits, r_margin, rtol=1e-4, atol=2e-3), "margin_logits mismatch"
    assert jnp.allclose(likelihood, r_lik, rtol=1e-3, atol=1e-2), "likelihood mismatch"

    print("KERNEL_OK")
</pallas_src>

<mosaic_0001>
module attributes {stable_mosaic.version = 11 : i64} {
  func.func @kernel(%arg0: i32, %arg1: i32, %arg2: memref<8x128xf32, #tpu.memory_space<vmem>>, %arg3: memref<128x128xf32, #tpu.memory_space<vmem>>, %arg4: memref<8x1xf32, #tpu.memory_space<vmem>>, %arg5: memref<1x128xf32, #tpu.memory_space<vmem>>, %arg6: memref<8x1xi32, #tpu.memory_space<vmem>>, %arg7: memref<8x128xf32, #tpu.memory_space<vmem>>, %arg8: memref<8x128xf32, #tpu.memory_space<vmem>>) attributes {dimension_semantics = [#tpu.dimension_semantics<parallel>, #tpu.dimension_semantics<parallel>], iteration_bounds = array<i64: 1, 1>, scalar_prefetch = 0 : i64, scratch_operands = 0 : i64, tpu.core_type = #tpu.core_type<tc>, window_params = [{transform_indices = @transform_0, window_bounds = array<i64: 8, 128>}, {transform_indices = @transform_1, window_bounds = array<i64: 128, 128>}, {transform_indices = @transform_2, window_bounds = array<i64: 8, 1>}, {transform_indices = @transform_3, window_bounds = array<i64: 1, 128>}, {transform_indices = @transform_4, window_bounds = array<i64: 8, 1>}, {transform_indices = @transform_5, window_bounds = array<i64: 8, 128>}, {transform_indices = @transform_6, window_bounds = array<i64: 8, 128>}]} {
    %c0 = arith.constant 0 : index
    %c0_0 = arith.constant 0 : index
    %0 = vector.load %arg2[%c0, %c0_0] : memref<8x128xf32, #tpu.memory_space<vmem>>, vector<8x128xf32>
    %c0_1 = arith.constant 0 : index
    %c0_2 = arith.constant 0 : index
    %1 = vector.load %arg3[%c0_1, %c0_2] : memref<128x128xf32, #tpu.memory_space<vmem>>, vector<128x128xf32>
    %c0_3 = arith.constant 0 : index
    %c0_4 = arith.constant 0 : index
    %2 = vector.load %arg6[%c0_3, %c0_4] : memref<8x1xi32, #tpu.memory_space<vmem>>, vector<8x1xi32>
    %cst = arith.constant dense<0.000000e+00> : vector<8x128xf32>
    %3 = tpu.matmul %0, %1, %cst {dimension_numbers = #tpu.dot_dimension_numbers<[1], [0], [0], [1], [0, 0, 1, 1], [], []>} : vector<8x128xf32>, vector<128x128xf32>, vector<8x128xf32> -> vector<8x128xf32>
    %c0_5 = arith.constant 0 : index
    %c0_6 = arith.constant 0 : index
    %4 = vector.load %arg4[%c0_5, %c0_6] : memref<8x1xf32, #tpu.memory_space<vmem>>, vector<8x1xf32>
    %5 = vector.broadcast %4 : vector<8x1xf32> to vector<8x128xf32>
    %6 = arith.addf %3, %5 : vector<8x128xf32>
    %c0_7 = arith.constant 0 : index
    %c0_8 = arith.constant 0 : index
    %7 = vector.load %arg5[%c0_7, %c0_8] : memref<1x128xf32, #tpu.memory_space<vmem>>, vector<1x128xf32>
    %8 = vector.broadcast %7 : vector<1x128xf32> to vector<8x128xf32>
    %9 = arith.addf %6, %8 : vector<8x128xf32>
    %cst_9 = arith.constant 0.000000e+00 : f32
    %10 = vector.broadcast %cst_9 : f32 to vector<8x128xf32>
    %11 = arith.minimumf %9, %10 : vector<8x128xf32>
    %12 = tpu.iota {dimensions = array<i32: 1>} : vector<8x128xi32>
    %c128_i32 = arith.constant 128 : i32
    %13 = arith.muli %arg1, %c128_i32 : i32
    %14 = vector.broadcast %13 : i32 to vector<8x128xi32>
    %15 = arith.addi %12, %14 : vector<8x128xi32>
    %16 = vector.broadcast %2 : vector<8x1xi32> to vector<8x128xi32>
    %17 = arith.cmpi eq, %15, %16 : vector<8x128xi32>
    %18 = arith.extui %17 : vector<8x128xi1> to vector<8x128xi32>
    %19 = arith.sitofp %18 : vector<8x128xi32> to vector<8x128xf32>
    %c0_10 = arith.constant 0 : index
    %c0_11 = arith.constant 0 : index
    %20 = vector.load %arg7[%c0_10, %c0_11] : memref<8x128xf32, #tpu.memory_space<vmem>>, vector<8x128xf32>
    tpu.vector_store %arg7[%c0_10, %c0_11], %11 {strides = array<i32>} : memref<8x128xf32, #tpu.memory_space<vmem>>, vector<8x128xf32>,
    %cst_12 = arith.constant 1.000000e+00 : f32
    %21 = vector.broadcast %cst_12 : f32 to vector<8x128xf32>
    %22 = arith.mulf %19, %21 : vector<8x128xf32>
    %cst_13 = arith.constant 1.000000e+00 : f32
    %23 = vector.broadcast %cst_13 : f32 to vector<8x128xf32>
    %24 = arith.addf %22, %23 : vector<8x128xf32>
    %25 = arith.mulf %11, %24 : vector<8x128xf32>
    %c0_14 = arith.constant 0 : index
    %c0_15 = arith.constant 0 : index
    %26 = vector.load %arg8[%c0_14, %c0_15] : memref<8x128xf32, #tpu.memory_space<vmem>>, vector<8x128xf32>
    tpu.vector_store %arg8[%c0_14, %c0_15], %25 {strides = array<i32>} : memref<8x128xf32, #tpu.memory_space<vmem>>, vector<8x128xf32>,
    return
  }
  func.func @transform_0(%arg0: i32, %arg1: i32) -> (i32, i32) {
    %c0_i32 = arith.constant 0 : i32
    %c0_i32_0 = arith.constant 0 : i32
    return %arg0, %c0_i32 : i32, i32
  }
  func.func @transform_1(%arg0: i32, %arg1: i32) -> (i32, i32) {
    %c0_i32 = arith.constant 0 : i32
    %c0_i32_0 = arith.constant 0 : i32
    return %c0_i32, %arg1 : i32, i32
  }
  func.func @transform_2(%arg0: i32, %arg1: i32) -> (i32, i32) {
    %c0_i32 = arith.constant 0 : i32
    %c0_i32_0 = arith.constant 0 : i32
    return %arg0, %c0_i32 : i32, i32
  }
  func.func @transform_3(%arg0: i32, %arg1: i32) -> (i32, i32) {
    %c0_i32 = arith.constant 0 : i32
    %c0_i32_0 = arith.constant 0 : i32
    return %c0_i32, %arg1 : i32, i32
  }
  func.func @transform_4(%arg0: i32, %arg1: i32) -> (i32, i32) {
    %c0_i32 = arith.constant 0 : i32
    %c0_i32_0 = arith.constant 0 : i32
    return %arg0, %c0_i32 : i32, i32
  }
  func.func @transform_5(%arg0: i32, %arg1: i32) -> (i32, i32) {
    %c0_i32 = arith.constant 0 : i32
    return %arg0, %arg1 : i32, i32
  }
  func.func @transform_6(%arg0: i32, %arg1: i32) -> (i32, i32) {
    %c0_i32 = arith.constant 0 : i32
    return %arg0, %arg1 : i32, i32
  }
}

</mosaic_0001>

<llo_original>
// kernel: tpu_custom_call.1
$region0: #{tpu_custom_call.1}
  #allocation0 [shape = 'u32[]', space=smem, size = 0x4, offset = 0x4, fixed_abs, tag = 'smem constant byte address 0x4 - core index']
  #allocation1 [shape = 'u32[144,128]{1,0:T(1,128)}', space=vmem, size = 0x12000, scoped, tag = 'internal scratch']
  %s0 = inlined_call_operand.vmem [shape: f32[8,128], index: 0, kind: input, shape index: {}]
  %s1 = inlined_call_operand.hbm [shape: f32[128,128], index: 1, kind: input, shape index: {}]
  %s2 = inlined_call_operand.vmem [shape: f32[8,1], index: 2, kind: input, shape index: {}]
  %s3 = inlined_call_operand.vmem [shape: f32[1,128], index: 3, kind: input, shape index: {}]
  %s4 = inlined_call_operand.vmem [shape: s32[8,1], index: 4, kind: input, shape index: {}]
  %s5 = inlined_call_operand.hbm [shape: f32[8,128], index: 5, kind: output, shape index: {0}]
  %s6 = inlined_call_operand.hbm [shape: f32[8,128], index: 6, kind: output, shape index: {1}]
  %7 = xla_tuple %s5, %s6
  %s8 = sld [smem:[#allocation0]]
  $region42: #{tpu_custom_call.1} parent=0
    _
  %s10 = ssub.s32 1, %s8
  %s11 = scalar_select 0, %s10, %s8
  $region1: #{tpu_custom_call.1} parent=0
    #allocation2 [shape = 'u8[65536]{0}', space=vmem, size = 0x10000, scoped, tag = 'input window, operand 1, single buffered']
    #allocation3 [shape = 's32[1]{0}', space=sflag, size = 0x4, scoped, tag = 'scoped memory for tpu_custom_call.1']
    #allocation4 [shape = 's32[1]{0}', space=sflag, size = 0x4, scoped, tag = 'scoped memory for tpu_custom_call.1']
    #allocation5 [shape = 'u8[4096]{0}', space=vmem, size = 0x1000, scoped, tag = 'output window, operand 0, single buffered']
    #allocation6 [shape = 'u8[4096]{0}', space=vmem, size = 0x1000, scoped, tag = 'output window, operand 1, single buffered']
    #allocation7 [shape = 's32[1]{0}', space=sflag, size = 0x4, scoped, tag = 'scoped memory for tpu_custom_call.1']
    %12 = vsyncpa [#allocation3], 0
    %13 = vsyncpa [#allocation4], 0
    %14 = vsyncpa [#allocation7], 0
    // Predicated region
    $region2: #{tpu_custom_call.1} parent=1 // pred_check
      _
    $region3: #{tpu_custom_call.1} parent=1 // pred_check_branch
      %16 = sbr.rel (0) target = $region5
    $region4: #{tpu_custom_call.1} parent=1 // pred_region
      _
    $region5: #{tpu_custom_call.1} parent=1 // pred_fallthru
      _
    // Predicated region
    $region6: #{tpu_custom_call.1} parent=1 // pred_check
      _
    $region7: #{tpu_custom_call.1} parent=1 // pred_check_branch
      %18 = sbr.rel (0) target = $region9
    $region8: #{tpu_custom_call.1} parent=1 // pred_region
      %s20 = ssub.s32 2048, 2048
      %21 = vsyncadd [#allocation3], %s20
      %s22 = sshll.u32 [#allocation2], 4
      %s23 = int_to_ptr.vmem [resolvable:$true] %s22
      %28 = dma.hbm_to_vmem [thread:$0]  %s1, 2048, %s23, [#allocation3], 128, 128, 8
    $region9: #{tpu_custom_call.1} parent=1 // pred_fallthru
      _
    // Predicated region
    $region10: #{tpu_custom_call.1} parent=1 // pred_check
      _
    $region11: #{tpu_custom_call.1} parent=1 // pred_check_branch
      %30 = sbr.rel (0) target = $region13
    $region12: #{tpu_custom_call.1} parent=1 // pred_region
      _
    $region13: #{tpu_custom_call.1} parent=1 // pred_fallthru
      _
    // Predicated region
    $region14: #{tpu_custom_call.1} parent=1 // pred_check
      _
    $region15: #{tpu_custom_call.1} parent=1 // pred_check_branch
      %32 = sbr.rel (0) target = $region17
    $region16: #{tpu_custom_call.1} parent=1 // pred_region
      _
    $region17: #{tpu_custom_call.1} parent=1 // pred_fallthru
      _
    // Predicated region
    $region18: #{tpu_custom_call.1} parent=1 // pred_check
      _
    $region19: #{tpu_custom_call.1} parent=1 // pred_check_branch
      %34 = sbr.rel (0) target = $region21
    $region20: #{tpu_custom_call.1} parent=1 // pred_region
      _
    $region21: #{tpu_custom_call.1} parent=1 // pred_fallthru
      _
    // Predicated region
    $region22: #{tpu_custom_call.1} parent=1 // pred_check
      _
    $region23: #{tpu_custom_call.1} parent=1 // pred_check_branch
      %36 = sbr.rel (0) target = $region25
    $region24: #{tpu_custom_call.1} parent=1 // pred_region
      %37 = dma.done [#allocation3], 2048
    $region25: #{tpu_custom_call.1} parent=1 // pred_fallthru
      _
    %v38 = vld [vmem:[%s0] sm:$0xff]
    %v39 = vld [vmem:[#allocation2] sm:$0xff]
    %v40 = vld [vmem:[#allocation2 + $0x8] sm:$0xff]
    %v41 = vld [vmem:[#allocation2 + $0x10] sm:$0xff]
    %v42 = vld [vmem:[#allocation2 + $0x18] sm:$0xff]
    %v43 = vld [vmem:[#allocation2 + $0x20] sm:$0xff]
    %v44 = vld [vmem:[#allocation2 + $0x28] sm:$0xff]
    %v45 = vld [vmem:[#allocation2 + $0x30] sm:$0xff]
    %v46 = vld [vmem:[#allocation2 + $0x38] sm:$0xff]
    %v47 = vld [vmem:[#allocation2 + $0x40] sm:$0xff]
    %v48 = vld [vmem:[#allocation2 + $0x48] sm:$0xff]
    %v49 = vld [vmem:[#allocation2 + $0x50] sm:$0xff]
    %v50 = vld [vmem:[#allocation2 + $0x58] sm:$0xff]
    %v51 = vld [vmem:[#allocation2 + $0x60] sm:$0xff]
    %v52 = vld [vmem:[#allocation2 + $0x68] sm:$0xff]
    %v53 = vld [vmem:[#allocation2 + $0x70] sm:$0xff]
    %v54 = vld [vmem:[#allocation2 + $0x78] sm:$0xff]
    %v55 = vld [vmem:[%s4] sm:$0xff]
    %v56 = vld [vmem:[%s2] sm:$0xff]
    %58 = vset.pattern.permute.xlu0 0
    %59 = vperm.xlu0 %58, %v56
    %v60 = vpop.permute.xlu0 %59
    %62 = vmatprep.subr.mxu0 0.0
    %63 = vmatpush1.msra.mxu0 %v39
    %64 = vmatprep.subr.mxu0 0.0
    %65 = vmatpush1.msra.mxu0 %v40
    %66 = vmatprep.subr.mxu0 0.0
    %67 = vmatpush1.msra.mxu0 %v41
    %68 = vmatprep.subr.mxu0 0.0
    %69 = vmatpush1.msra.mxu0 %v42
    %70 = vmatprep.subr.mxu0 0.0
    %71 = vmatpush1.msra.mxu0 %v43
    %72 = vmatprep.subr.mxu0 0.0
    %73 = vmatpush1.msra.mxu0 %v44
    %74 = vmatprep.subr.mxu0 0.0
    %75 = vmatpush1.msra.mxu0 %v45
    %76 = vmatprep.subr.mxu0 0.0
    %77 = vmatpush1.msra.mxu0 %v46
    %78 = vmatprep.subr.mxu0 0.0
    %79 = vmatpush1.msra.mxu0 %v47
    %80 = vmatprep.subr.mxu0 0.0
    %81 = vmatpush1.msra.mxu0 %v48
    %82 = vmatprep.subr.mxu0 0.0
    %83 = vmatpush1.msra.mxu0 %v49
    %84 = vmatprep.subr.mxu0 0.0
    %85 = vmatpush1.msra.mxu0 %v50
    %86 = vmatprep.subr.mxu0 0.0
    %87 = vmatpush1.msra.mxu0 %v51
    %88 = vmatprep.subr.mxu0 0.0
    %89 = vmatpush1.msra.mxu0 %v52
    %90 = vmatprep.subr.mxu0 0.0
    %91 = vmatpush1.msra.mxu0 %v53
    %92 = vmatprep.subr.mxu0 0.0
    %93 = vmatpush1.msra.mxu0 %v54
    %94 = vmatprep.subr.mxu0 0.0
    %95 = vmatpush1.msra.mxu0 0.0
    %96 = vmatprep.subr.mxu0 0.0
    %97 = vmatpush1.msra.mxu0 0.0
    %98 = vmatprep.subr.mxu0 0.0
    %99 = vmatpush1.msra.mxu0 0.0
    %100 = vmatprep.subr.mxu0 0.0
    %101 = vmatpush1.msra.mxu0 0.0
    %102 = vmatprep.subr.mxu0 0.0
    %103 = vmatpush1.msra.mxu0 0.0
    %104 = vmatprep.subr.mxu0 0.0
    %105 = vmatpush1.msra.mxu0 0.0
    %106 = vmatprep.subr.mxu0 0.0
    %107 = vmatpush1.msra.mxu0 0.0
    %108 = vmatprep.subr.mxu0 0.0
    %109 = vmatpush1.msra.mxu0 0.0
    %110 = vmatprep.subr.mxu0 0.0
    %111 = vmatpush1.msra.mxu0 0.0
    %112 = vmatprep.subr.mxu0 0.0
    %113 = vmatpush1.msra.mxu0 0.0
    %114 = vmatprep.subr.mxu0 0.0
    %115 = vmatpush1.msra.mxu0 0.0
    %116 = vmatprep.subr.mxu0 0.0
    %117 = vmatpush1.msra.mxu0 0.0
    %118 = vmatprep.subr.mxu0 0.0
    %119 = vmatpush1.msra.mxu0 0.0
    %120 = vmatprep.subr.mxu0 0.0
    %121 = vmatpush1.msra.mxu0 0.0
    %122 = vmatprep.subr.mxu0 0.0
    %123 = vmatpush1.msra.mxu0 0.0
    %124 = vmatprep.subr.mxu0 0.0
    %125 = vmatpush1.msra.mxu0 0.0
    %126 = vmatprep.mubr.f32.mxu0 0.0
    %127 = vmatmul.mubr.f32.gmra.mrb[0].mxu0 %v38
    %v128 = vpop.f32.mrb[0].mxu0
    %v129 = vadd.f32 %v60, %v128
    %v130 = vpop.f32.mrb[0].mxu0
    %131 = vdwg.mxu0
    %v132 = vld [vmem:[%s3] sm:$0x1]
    %v134 = vlaneseq
    %v135 = vshrl.u32 %v134, 7
    %v136 = vsub.s32 0, %v135
    %v137 = vrot.slane %v132, %v136
    %v139 = vadd.f32 %v129, %v137
    %v140 = vmin.f32 %v139, 0.0
    %v141 = vlaneseq
    %v142 = vand.u32 %v141, 127
    %s143 = smul.u32 0, 128
    %v144 = vstv %s143
    %v145 = vadd.s32 %v142, %v144
    %146 = vset.pattern.permute.xlu0 0
    %147 = vperm.xlu0 %146, %v55
    %v148 = vpop.permute.xlu0 %147
    %vm149 = vcmp.eq.s32.totalorder %v145, %v148
    %v150 = vsel %vm149, 1, 0
    %v151 = vcvt.s32.f32 %v150
    %152 = vst [vmem:[#allocation5] sm:$0xff] %v140
    %v153 = vadd.f32 %v151, 1.0
    %v154 = vmul.f32 %v140, %v153
    %155 = vst [vmem:[#allocation6] sm:$0xff] %v154
    // Predicated region
    $region26: #{tpu_custom_call.1} parent=1 // pred_check
      _
    $region27: #{tpu_custom_call.1} parent=1 // pred_check_branch
      %157 = sbr.rel (0) target = $region29
    $region28: #{tpu_custom_call.1} parent=1 // pred_region
      %s159 = ssub.s32 128, 128
      %160 = vsyncadd [#allocation4], %s159
      %s162 = sshll.u32 [#allocation5], 4
      %s163 = int_to_ptr.vmem [resolvable:$true] %s162
      %165 = dma.vmem_to_hbm [thread:$0]  %s163, 128, %s5, [#allocation4]
    $region29: #{tpu_custom_call.1} parent=1 // pred_fallthru
      _
    // Predicated region
    $region30: #{tpu_custom_call.1} parent=1 // pred_check
      _
    $region31: #{tpu_custom_call.1} parent=1 // pred_check_branch
      %167 = sbr.rel (0) target = $region33
    $region32: #{tpu_custom_call.1} parent=1 // pred_region
      %s169 = ssub.s32 128, 128
      %170 = vsyncadd [#allocation7], %s169
      %s172 = sshll.u32 [#allocation6], 4
      %s173 = int_to_ptr.vmem [resolvable:$true] %s172
      %175 = dma.vmem_to_hbm [thread:$0]  %s173, 128, %s6, [#allocation7]
    $region33: #{tpu_custom_call.1} parent=1 // pred_fallthru
      _
    // Predicated region
    $region34: #{tpu_custom_call.1} parent=1 // pred_check
      _
    $region35: #{tpu_custom_call.1} parent=1 // pred_check_branch
      %177 = sbr.rel (0) target = $region37
    $region36: #{tpu_custom_call.1} parent=1 // pred_region
      %178 = dma.done [#allocation4], 128
    $region37: #{tpu_custom_call.1} parent=1 // pred_fallthru
      _
    // Predicated region
    $region38: #{tpu_custom_call.1} parent=1 // pred_check
      _
    $region39: #{tpu_custom_call.1} parent=1 // pred_check_branch
      %180 = sbr.rel (0) target = $region41
    $region40: #{tpu_custom_call.1} parent=1 // pred_region
      %181 = dma.done [#allocation7], 128
    $region41: #{tpu_custom_call.1} parent=1 // pred_fallthru
      _
    %182 = vsyncpa [#allocation3], 1
    %183 = vsyncpa [#allocation4], 1
    %184 = vsyncpa [#allocation7], 1

</llo_original>
